<compile_context>
chip_gen: v7x
topology: tpu7x:2x2x1
jax: 0.10.0
libtpu: 0.0.40
codegen_flags: <defaults>
</compile_context>

<pallas_src>
import jax
import jax.numpy as jnp
import numpy as np
from jax import lax
from jax.experimental import pallas as pl
from jax.experimental.pallas import tpu as pltpu


def _round_up(n, m):
    return ((n + m - 1) // m) * m


def _cdiv(n, m):
    return (n + m - 1) // m


def _per_buffer_budget_bytes():
    """~1/8 of physical VMEM per pipelined x buffer (double-buffered -> ~1/4)."""
    cap = 64 * 1024 * 1024  # conservative fallback (v7x physical VMEM per TC)
    try:
        cap = int(getattr(pltpu.get_tpu_info(), "vmem_capacity_bytes", cap))
    except Exception:
        pass
    return max(4 * 1024 * 1024, cap // 8)


def _make_kernel(D, TK, need_col_mask):
    def kernel(x_ref, w_ref, o_ref, acc_ref):
        # x_ref: (TB, TK)  w_ref: (2, TK)  o_ref: (1, 1, TB)  acc_ref: (1, TB) f32
        k = pl.program_id(1)

        @pl.when(k == 0)
        def _init():
            acc_ref[...] = jnp.zeros_like(acc_ref)

        x = x_ref[...].astype(jnp.float32)
        w = w_ref[...].astype(jnp.float32)
        w1 = w[0:1, :]                      # multiplies x
        w2 = w[1:2, :]                      # multiplies x**2
        # Fused: x*w1 + x^2*w2 == x * (w1 + x*w2)  -- pure VPU, no MXU.
        feat = x * (w1 + x * w2)            # (TB, TK)

        if need_col_mask:
            # Ragged last K tile: zero columns >= D (x and w hold garbage there).
            col = k * TK + lax.broadcasted_iota(jnp.int32, feat.shape, 1)
            feat = jnp.where(col < D, feat, 0.0)

        # Cross-lane reduce (XLU slot) -> lane-dense partial row-sums.
        acc_ref[...] += jnp.sum(feat, axis=1)[None, :]

        @pl.when(k == pl.num_programs(1) - 1)
        def _store():
            # Lane-dense store: batch sits on the lane axis of the output tile.
            o_ref[...] = acc_ref[...][None, :, :].astype(o_ref.dtype)

    return kernel


def simple_forward(x, weight, activation=None):
    """x: (B, D).  weight: (1, 2*D) = fc1 weight (no bias).  Returns (B, 1)."""
    B, D = x.shape
    assert weight.shape == (1, 2 * D)

    # Row-major reshape (1, 2D) -> (2, D) == stack([W[:, :D], W[:, D:]]).  Free.
    w = weight.reshape(2, D)

    itemsize = jnp.dtype(x.dtype).itemsize
    budget = _per_buffer_budget_bytes()

    # ---- Feature (K) tiling: only when a 128-row, full-D tile would blow VMEM.
    if 128 * _round_up(D, 128) * itemsize <= budget:
        TK = D
    else:
        TK = max(128, ((budget // (128 * itemsize)) // 128) * 128)
        TK = min(TK, _round_up(D, 128))
    n_k = _cdiv(D, TK)
    need_col_mask = (D % TK) != 0

    # ---- Batch (B) tiling: biggest lane-dense tile under the per-buffer budget.
    tk_vmem = _round_up(TK, 128)                       # lane-padded VMEM width
    max_rows = max(128, ((budget // (tk_vmem * itemsize)) // 128) * 128)
    TB = min(_round_up(B, 128), max_rows)
    if TB >= B:
        if B <= 128:
            TB = B                                     # single exact block
        else:
            # v7x megacore: guarantee >= 2 batch tiles so both TensorCores get
            # work under dimension_semantics=("parallel", ...).
            TB = _round_up(_cdiv(B, 2), 128)
    n_b = _cdiv(B, TB)

    # Explicit scoped-VMEM limit: double-buffered x/w/out + accumulator + margin.
    x_buf = _round_up(TB, 8) * tk_vmem * itemsize
    w_buf = 8 * tk_vmem * itemsize
    o_buf = 8 * _round_up(TB, 128) * itemsize
    acc_buf = 8 * _round_up(TB, 128) * 4
    vmem_limit = int(2 * (x_buf + w_buf + o_buf) + acc_buf + (8 << 20))

    kernel = _make_kernel(D, TK, need_col_mask)

    # No padding: ragged last batch tile reads unspecified rows past B; they
    # only affect output rows that are sliced off below (no cross-row coupling).
    out = pl.pallas_call(
        kernel,
        out_shape=jax.ShapeDtypeStruct((n_b, 1, TB), x.dtype),
        grid=(n_b, n_k),                               # reduction axis last
        in_specs=[
            pl.BlockSpec((TB, TK), lambda i, k: (i, k)),   # batch/feature-tiled x
            pl.BlockSpec((2, TK), lambda i, k: (0, k)),    # resident weights
        ],
        out_specs=pl.BlockSpec((1, 1, TB), lambda i, k: (i, 0, 0)),
        scratch_shapes=[pltpu.VMEM((1, TB), jnp.float32)],
        compiler_params=pltpu.CompilerParams(
            dimension_semantics=("parallel", "arbitrary"),
            vmem_limit_bytes=vmem_limit,
        ),
    )(x, w)

    # Layout plumbing only: (n_b, 1, TB) -> (n_b*TB, 1) -> (B, 1).
    return out.reshape(n_b * TB, 1)[:B]


if __name__ == "__main__":
    # Small shapes consistent with the module: input_size=4, batch=8.
    input_size = 4
    batch = 8

    key = jax.random.PRNGKey(0)
    kx, kw = jax.random.split(key, 2)

    x = jax.random.normal(kx, (batch, input_size), dtype=jnp.float32)

    # fc1 = Linear(2*input_size, 1, bias=None): weight shape (1, 2*input_size),
    # PyTorch default init ~ U(-1/sqrt(fan_in), 1/sqrt(fan_in)).
    fan_in = 2 * input_size
    bound = 1.0 / np.sqrt(fan_in)
    fc1_weight = jax.random.uniform(
        kw, (1, 2 * input_size), dtype=jnp.float32, minval=-bound, maxval=bound
    )
    # eta parameter (unused in forward, kept for parity with the module).
    eta = jnp.array([1.0], dtype=jnp.float32)  # noqa: F841

    out = simple_forward(x, fc1_weight)
    out = jax.block_until_ready(out)

    # Pure-JAX reference of the PyTorch forward.
    ref = jnp.concatenate([x, x ** 2], axis=1) @ fc1_weight.T
    assert out.shape == (batch, 1)
    assert np.allclose(np.asarray(out), np.asarray(ref), rtol=1e-5, atol=1e-5)

    print("KERNEL_OK")
</pallas_src>

<mosaic_0001>
module attributes {stable_mosaic.version = 11 : i64} {
  func.func @kernel(%arg0: i32, %arg1: i32, %arg2: memref<8x4xf32, #tpu.memory_space<vmem>>, %arg3: memref<2x4xf32, #tpu.memory_space<vmem>>, %arg4: memref<1x1x8xf32, #tpu.memory_space<vmem>>, %arg5: memref<1x8xf32, #tpu.memory_space<vmem>>) attributes {dimension_semantics = [#tpu.dimension_semantics<parallel>, #tpu.dimension_semantics<arbitrary>], iteration_bounds = array<i64: 1, 1>, scalar_prefetch = 0 : i64, scratch_operands = 1 : i64, tpu.core_type = #tpu.core_type<tc>, window_params = [{transform_indices = @transform_0, window_bounds = array<i64: 8, 4>}, {transform_indices = @transform_1, window_bounds = array<i64: 2, 4>}, {transform_indices = @transform_2, window_bounds = array<i64: 1, 1, 8>}]} {
    %c0_i32 = arith.constant 0 : i32
    %0 = arith.cmpi eq, %arg1, %c0_i32 : i32
    %1 = arith.extui %0 : i1 to i32
    %c0_i32_0 = arith.constant 0 : i32
    %2 = arith.cmpi ne, %1, %c0_i32_0 : i32
    scf.if %2 {
      %cst_10 = arith.constant 0.000000e+00 : f32
      %20 = vector.broadcast %cst_10 : f32 to vector<1x8xf32>
      %c0_11 = arith.constant 0 : index
      %c0_12 = arith.constant 0 : index
      %21 = vector.load %arg5[%c0_11, %c0_12] : memref<1x8xf32, #tpu.memory_space<vmem>>, vector<1x8xf32>
      tpu.vector_store %arg5[%c0_11, %c0_12], %20 {strides = array<i32>} : memref<1x8xf32, #tpu.memory_space<vmem>>, vector<1x8xf32>,
    } else {
    }
    %c0 = arith.constant 0 : index
    %c0_1 = arith.constant 0 : index
    %3 = vector.load %arg2[%c0, %c0_1] : memref<8x4xf32, #tpu.memory_space<vmem>>, vector<8x4xf32>
    %c0_2 = arith.constant 0 : index
    %c0_3 = arith.constant 0 : index
    %4 = vector.load %arg3[%c0_2, %c0_3] : memref<2x4xf32, #tpu.memory_space<vmem>>, vector<2x4xf32>
    %5 = vector.extract_strided_slice %4 {offsets = [0, 0], sizes = [1, 4], strides = [1, 1]} : vector<2x4xf32> to vector<1x4xf32>
    %6 = vector.extract_strided_slice %4 {offsets = [1, 0], sizes = [1, 4], strides = [1, 1]} : vector<2x4xf32> to vector<1x4xf32>
    %7 = vector.broadcast %6 : vector<1x4xf32> to vector<8x4xf32>
    %8 = arith.mulf %3, %7 : vector<8x4xf32>
    %9 = vector.broadcast %5 : vector<1x4xf32> to vector<8x4xf32>
    %10 = arith.addf %9, %8 : vector<8x4xf32>
    %11 = arith.mulf %3, %10 : vector<8x4xf32>
    %c0_4 = arith.constant 0 : index
    %c0_5 = arith.constant 0 : index
    %12 = vector.load %arg5[%c0_4, %c0_5] : memref<1x8xf32, #tpu.memory_space<vmem>>, vector<1x8xf32>
    %cst = arith.constant dense<0.000000e+00> : vector<8xf32>
    %13 = vector.multi_reduction <add>, %11, %cst [1] : vector<8x4xf32> to vector<8xf32>
    %14 = vector.shape_cast %13 : vector<8xf32> to vector<1x8xf32>
    %15 = arith.addf %12, %14 : vector<1x8xf32>
    %c0_6 = arith.constant 0 : index
    %c0_7 = arith.constant 0 : index
    %16 = vector.load %arg5[%c0_6, %c0_7] : memref<1x8xf32, #tpu.memory_space<vmem>>, vector<1x8xf32>
    tpu.vector_store %arg5[%c0_6, %c0_7], %15 {strides = array<i32>} : memref<1x8xf32, #tpu.memory_space<vmem>>, vector<1x8xf32>,
    %c0_i32_8 = arith.constant 0 : i32
    %17 = arith.cmpi eq, %arg1, %c0_i32_8 : i32
    %18 = arith.extui %17 : i1 to i32
    %c0_i32_9 = arith.constant 0 : i32
    %19 = arith.cmpi ne, %18, %c0_i32_9 : i32
    scf.if %19 {
      %c0_10 = arith.constant 0 : index
      %c0_11 = arith.constant 0 : index
      %20 = vector.load %arg5[%c0_10, %c0_11] : memref<1x8xf32, #tpu.memory_space<vmem>>, vector<1x8xf32>
      %21 = vector.shape_cast %20 : vector<1x8xf32> to vector<1x1x8xf32>
      %c0_12 = arith.constant 0 : index
      %c0_13 = arith.constant 0 : index
      %c0_14 = arith.constant 0 : index
      %22 = vector.load %arg4[%c0_12, %c0_13, %c0_14] : memref<1x1x8xf32, #tpu.memory_space<vmem>>, vector<1x1x8xf32>
      tpu.vector_store %arg4[%c0_12, %c0_13, %c0_14], %21 {strides = array<i32>} : memref<1x1x8xf32, #tpu.memory_space<vmem>>, vector<1x1x8xf32>,
    } else {
    }
    return
  }
  func.func @transform_0(%arg0: i32, %arg1: i32) -> (i32, i32) {
    %c0_i32 = arith.constant 0 : i32
    return %arg0, %arg1 : i32, i32
  }
  func.func @transform_1(%arg0: i32, %arg1: i32) -> (i32, i32) {
    %c0_i32 = arith.constant 0 : i32
    %c0_i32_0 = arith.constant 0 : i32
    return %c0_i32, %arg1 : i32, i32
  }
  func.func @transform_2(%arg0: i32, %arg1: i32) -> (i32, i32, i32) {
    %c0_i32 = arith.constant 0 : i32
    %c0_i32_0 = arith.constant 0 : i32
    %c0_i32_1 = arith.constant 0 : i32
    return %arg0, %c0_i32, %c0_i32_0 : i32, i32, i32
  }
}

</mosaic_0001>

<llo_original>
// kernel: tpu_custom_call.1
$region0: #{tpu_custom_call.1}
  #allocation0 [shape = 'u32[]', space=smem, size = 0x4, offset = 0x4, fixed_abs, tag = 'smem constant byte address 0x4 - core index']
  #allocation1 [shape = 'u32[144,128]{1,0:T(1,128)}', space=vmem, size = 0x12000, scoped, tag = 'internal scratch']
  #allocation2 [shape = 'f32[1,8]{1,0:T(1,128)}', space=vmem, size = 0x200, scoped, tag = 'scratch operand']
  %s0 = inlined_call_operand.vmem [shape: f32[8,4], index: 0, kind: input, shape index: {}]
  %s1 = inlined_call_operand.vmem [shape: f32[2,4], index: 1, kind: input, shape index: {}]
  %s2 = inlined_call_operand.hbm [shape: f32[1,1,8], index: 2, kind: output, shape index: {}]
  %s3 = sld [smem:[#allocation0]]
  $region26: #{tpu_custom_call.1} parent=0
    _
  %s5 = ssub.s32 1, %s3
  %s6 = scalar_select 0, %s5, %s3
  $region1: #{tpu_custom_call.1} parent=0
    #allocation3 [shape = 'u8[512]{0}', space=vmem, size = 0x400, scoped, tag = 'output window, operand 0, single buffered']
    #allocation4 [shape = 's32[1]{0}', space=sflag, size = 0x4, scoped, tag = 'scoped memory for tpu_custom_call.1']
    %7 = vsyncpa [#allocation4], 0
    // Predicated region
    $region2: #{tpu_custom_call.1} parent=1 // pred_check
      _
    $region3: #{tpu_custom_call.1} parent=1 // pred_check_branch
      %9 = sbr.rel (0) target = $region5
    $region4: #{tpu_custom_call.1} parent=1 // pred_region
      _
    $region5: #{tpu_custom_call.1} parent=1 // pred_fallthru
      _
    // Predicated region
    $region6: #{tpu_custom_call.1} parent=1 // pred_check
      _
    $region7: #{tpu_custom_call.1} parent=1 // pred_check_branch
      %11 = sbr.rel (0) target = $region9
    $region8: #{tpu_custom_call.1} parent=1 // pred_region
      _
    $region9: #{tpu_custom_call.1} parent=1 // pred_fallthru
      _
    %p12 = scmp.eq.s32.totalorder 0, 0
    // Predicated region
    $region10: #{tpu_custom_call.1} parent=1 // pred_check
      %p13 = pneg %p12
    $region11: #{tpu_custom_call.1} parent=1 // pred_check_branch
      %15 = sbr.rel (%p13) target = $region13
    $region12: #{tpu_custom_call.1} parent=1 // pred_region
      %vm16 = vcmask 57344
      %17 = vst.msk [vmem:[#allocation2] sm:$0x1] %vm16, 0.0
    $region13: #{tpu_custom_call.1} parent=1 // pred_fallthru
      _
    %v18 = vld [vmem:[%s0] sm:$0xff]
    %v19 = vld [vmem:[%s1] sm:$0x3]
    %v20 = vlaneseq
    %v21 = vshrl.u32 %v20, 7
    %v22 = vsub.s32 1, %v21
    %v23 = vrot.slane %v19, %v22
    %v24 = vmul.f32 %v18, %v23
    %v25 = vlaneseq
    %v26 = vshrl.u32 %v25, 7
    %v27 = vsub.s32 0, %v26
    %v28 = vrot.slane %v19, %v27
    %v29 = vadd.f32 %v28, %v24
    %v30 = vmul.f32 %v18, %v29
    %v31 = vld [vmem:[#allocation2] sm:$0x1]
    %vm32 = vcmask 31744
    %v33 = vsel %vm32, %v30, 0.0
    %34 = vadd.xlane.f32.xlu0 %v33
    %v35 = vpop.xlane.xlu0 %34
    %v37 = vlaneseq
    %v38 = vshrl.u32 %v37, 7
    %v39 = vsub.s32 0, %v38
    %v40 = vrot.slane %v35, %v39
    %v41 = vlaneseq
    %v42 = vshrl.u32 %v41, 7
    %v43 = vsub.s32 1, %v42
    %v44 = vrot.slane %v35, %v43
    %v45 = vlaneseq
    %v46 = vshrl.u32 %v45, 7
    %v47 = vsub.s32 2, %v46
    %v48 = vrot.slane %v35, %v47
    %v49 = vlaneseq
    %v50 = vshrl.u32 %v49, 7
    %v51 = vsub.s32 3, %v50
    %v52 = vrot.slane %v35, %v51
    %v53 = vlaneseq
    %v54 = vshrl.u32 %v53, 7
    %v55 = vsub.s32 4, %v54
    %v56 = vrot.slane %v35, %v55
    %v57 = vlaneseq
    %v58 = vshrl.u32 %v57, 7
    %v59 = vsub.s32 5, %v58
    %v60 = vrot.slane %v35, %v59
    %v61 = vlaneseq
    %v62 = vshrl.u32 %v61, 7
    %v63 = vsub.s32 6, %v62
    %v64 = vrot.slane %v35, %v63
    %v65 = vlaneseq
    %v66 = vshrl.u32 %v65, 7
    %v67 = vsub.s32 7, %v66
    %v68 = vrot.slane %v35, %v67
    %v69 = vcombine.low %v40, %v44
    %v70 = vcombine.low %v48, %v52
    %v71 = vcombine.low %v56, %v60
    %v72 = vcombine.low %v64, %v68
    %v74 = vunpack.c.l.s4 1966171168
    %v75 = vunpack.c.0.s8 %v74
    %v76 = vlaneseq
    %v77 = vshrl.u32 %v76, 7
    %v78 = vsub.s32 %v75, %v77
    %v79 = vrot.slane %v69, %v78
    %v81 = vunpack.c.l.s4 1966171168
    %v82 = vunpack.c.0.s8 %v81
    %v83 = vlaneseq
    %v84 = vshrl.u32 %v83, 7
    %v85 = vsub.s32 %v82, %v84
    %v86 = vrot.slane %v70, %v85
    %v88 = vunpack.c.l.s4 1966171168
    %v89 = vunpack.c.0.s8 %v88
    %v90 = vlaneseq
    %v91 = vshrl.u32 %v90, 7
    %v92 = vsub.s32 %v89, %v91
    %v93 = vrot.slane %v71, %v92
    %v95 = vunpack.c.l.s4 1966171168
    %v96 = vunpack.c.0.s8 %v95
    %v97 = vlaneseq
    %v98 = vshrl.u32 %v97, 7
    %v99 = vsub.s32 %v96, %v98
    %v100 = vrot.slane %v72, %v99
    %v101 = vcombine.low %v79, %v86
    %v102 = vcombine.low %v93, %v100
    %v104 = vunpack.c.l.s4 1966171168
    %v105 = vunpack.c.0.s8 %v104
    %v106 = vlaneseq
    %v107 = vshrl.u32 %v106, 7
    %v108 = vsub.s32 %v105, %v107
    %v109 = vrot.slane %v101, %v108
    %v111 = vunpack.c.l.s4 1966171168
    %v112 = vunpack.c.0.s8 %v111
    %v113 = vlaneseq
    %v114 = vshrl.u32 %v113, 7
    %v115 = vsub.s32 %v112, %v114
    %v116 = vrot.slane %v102, %v115
    %v117 = vcombine.low %v109, %v116
    %118 = vset.pattern.permute.xlu0 0
    %119 = vperm.xlu0 %118, %v117
    %v120 = vpop.permute.xlu0 %119
    %v121 = vlaneseq
    %v122 = vand.u32 %v121, 127
    %v123 = vlaneseq
    %v124 = vshrl.u32 %v123, 7
    %v125 = vsub.s32 %v122, %v124
    %v126 = vrot.slane %v120, %v125
    %v128 = vunpack.c.l.s4 1966171168
    %v129 = vunpack.c.0.s8 %v128
    %v130 = vlaneseq
    %v131 = vshrl.u32 %v130, 7
    %v132 = vsub.s32 %v129, %v131
    %v133 = vrot.slane %v126, %v132
    %v135 = vunpack.c.l.s4 1966171168
    %v136 = vunpack.c.0.s8 %v135
    %v137 = vlaneseq
    %v138 = vshrl.u32 %v137, 7
    %v139 = vsub.s32 %v136, %v138
    %v140 = vrot.slane %v133, %v139
    %v142 = vadd.f32 %v31, %v140
    %vm143 = vcmask 57344
    %144 = vst.msk [vmem:[#allocation2] sm:$0x1] %vm143, %v142
    // Predicated region
    $region14: #{tpu_custom_call.1} parent=1 // pred_check
      %p145 = pneg %p12
    $region15: #{tpu_custom_call.1} parent=1 // pred_check_branch
      %147 = sbr.rel (%p145) target = $region17
    $region16: #{tpu_custom_call.1} parent=1 // pred_region
      %v148 = vld [vmem:[#allocation2] sm:$0x1]
      %149 = vst.msk [vmem:[#allocation3] sm:$0x1] %vm143, %v148
    $region17: #{tpu_custom_call.1} parent=1 // pred_fallthru
      _
    // Predicated region
    $region18: #{tpu_custom_call.1} parent=1 // pred_check
      _
    $region19: #{tpu_custom_call.1} parent=1 // pred_check_branch
      %151 = sbr.rel (0) target = $region21
    $region20: #{tpu_custom_call.1} parent=1 // pred_region
      %s153 = ssub.s32 16, 16
      %154 = vsyncadd [#allocation4], %s153
      %s156 = sshll.u32 [#allocation3], 4
      %s157 = int_to_ptr.vmem [resolvable:$true] %s156
      %159 = dma.vmem_to_hbm [thread:$0]  %s157, 16, %s2, [#allocation4]
    $region21: #{tpu_custom_call.1} parent=1 // pred_fallthru
      _
    // Predicated region
    $region22: #{tpu_custom_call.1} parent=1 // pred_check
      _
    $region23: #{tpu_custom_call.1} parent=1 // pred_check_branch
      %161 = sbr.rel (0) target = $region25
    $region24: #{tpu_custom_call.1} parent=1 // pred_region
      %162 = dma.done [#allocation4], 16
    $region25: #{tpu_custom_call.1} parent=1 // pred_fallthru
      _
    %163 = vsyncpa [#allocation4], 1

</llo_original>
